<compile_context>
chip_gen: v7x
topology: tpu7x:2x2x1
jax: 0.10.0
libtpu: 0.0.40
codegen_flags: <defaults>
</compile_context>

<pallas_src>
import math

import jax
import jax.numpy as jnp
from jax.experimental import pallas as pl
from jax.experimental.pallas import tpu as pltpu


_LANE = 128
_TARGET_LANE_WIDTH = 1024                    # widen folded lane width toward this
_MAX_LANE_TILE = 16384                       # keep dt == full channel extent up to this
_LANE_TILE_SPLIT = 8192                      # channel tile when d_eff is huge
_TILE_VMEM_BUDGET_BYTES = 16 * 1024 * 1024   # total across 2x(in)+2x(out) pipelined bufs
_VMEM_LIMIT_BYTES = 32 * 1024 * 1024         # safe on v5e/v6e (128 MiB) and v7x (64 MiB)


def _layer_scale_kernel(x_ref, gamma_ref, o_ref):
    # x_ref:     (rt, dt) tile of the flattened input
    # gamma_ref: (1, dt)  scale row (sublane broadcast is free on the VPU)
    # o_ref:     (rt, dt) output tile
    o_ref[...] = x_ref[...] * gamma_ref[...]


def _sublane(dtype) -> int:
    # Rows per vreg: 8 for 32-bit, 16 for 16-bit, 32 for 8-bit dtypes.
    return max(8, 32 // jnp.dtype(dtype).itemsize)


def _fold_factor(d: int, rows: int) -> int:
    """Rows folded into the lane axis so the folded width is a multiple of 128."""
    if d % _LANE == 0:
        return 1
    k = _LANE // math.gcd(d, _LANE)  # minimal fold: k*d % 128 == 0
    # Widen toward the target lane width while there are enough rows to fill
    # at least one folded row (keeps zero-padding bounded for tiny inputs).
    while k * d < _TARGET_LANE_WIDTH and k * 2 <= max(rows, 1):
        k *= 2
    return k


def _tiled_gamma(gamma, k: int, dtype, cache):
    key = (k, jnp.dtype(dtype).name)
    if cache is not None and key in cache:
        return cache[key]
    g = gamma.astype(dtype)
    if k > 1:
        g = jnp.tile(g, k)
    g = g.reshape(1, g.shape[0])
    if cache is not None:
        cache[key] = g
    return g


def layer_scale(x: jax.Array, gamma: jax.Array, *, inplace: bool = False,
                tiled_gamma_cache=None) -> jax.Array:
    """Applies per-channel scaling: out = x * gamma, gamma shape (D,)."""
    orig_shape = x.shape
    d = orig_shape[-1]
    assert gamma.shape == (d,), f"gamma shape {gamma.shape} != ({d},)"
    if x.size == 0:
        return x

    x2 = x.reshape(-1, d)
    rows = x2.shape[0]

    # Lane-densify: fold k rows into the lane axis so the last dim is a
    # multiple of 128 (unmasked stores). Zero-pad rows if rows % k != 0.
    k = _fold_factor(d, rows)
    rows_p = rows
    if k > 1:
        rows_p = -(-rows // k) * k
        if rows_p != rows:
            x2 = jnp.pad(x2, ((0, rows_p - rows), (0, 0)))
        x2 = x2.reshape(rows_p // k, k * d)
    rows_eff, d_eff = x2.shape

    gamma2 = _tiled_gamma(gamma, k, x.dtype, tiled_gamma_cache)

    itemsize = jnp.dtype(x.dtype).itemsize
    sub = _sublane(x.dtype)

    # Channel tile: full extent (contiguous DMA, j-grid of 1, gamma never
    # re-streamed) unless the channel count is very large.
    dt = d_eff if d_eff <= _MAX_LANE_TILE else _LANE_TILE_SPLIT

    # Row tile: sized purely by the VMEM budget (double-buffered in + out),
    # aligned to the sublane count. cdiv grid masks the ragged row tail.
    rt_budget = _TILE_VMEM_BUDGET_BYTES // (4 * dt * itemsize)
    rt_budget = max(sub, (rt_budget // sub) * sub)
    rt = min(rows_eff, rt_budget)

    # Megacore (v7x has 2 TensorCores): make sure the parallel rows axis has
    # >= 2 blocks whenever there is more than one vreg-row of work.
    if rows_eff > sub and pl.cdiv(rows_eff, rt) < 2:
        half = pl.cdiv(rows_eff, 2)
        rt = max(sub, ((half + sub - 1) // sub) * sub)

    grid = (pl.cdiv(rows_eff, rt), pl.cdiv(d_eff, dt))

    out2 = pl.pallas_call(
        _layer_scale_kernel,
        out_shape=jax.ShapeDtypeStruct((rows_eff, d_eff), x.dtype),
        grid_spec=pltpu.PrefetchScalarGridSpec(
            num_scalar_prefetch=0,
            grid=grid,
            in_specs=[
                pl.BlockSpec((rt, dt), lambda i, j: (i, j)),
                pl.BlockSpec((1, dt), lambda i, j: (0, j)),
            ],
            out_specs=pl.BlockSpec((rt, dt), lambda i, j: (i, j)),
        ),
        compiler_params=pltpu.CompilerParams(
            dimension_semantics=("parallel", "parallel"),
            vmem_limit_bytes=_VMEM_LIMIT_BYTES,
        ),
        # Torch's inplace=True (x.mul_) maps to buffer reuse; HBM traffic is
        # unchanged (still read+write) but the extra output allocation goes away.
        input_output_aliases=({0: 0} if inplace else {}),
    )(x2, gamma2)

    if k > 1:
        out2 = out2.reshape(rows_p, d)
        if rows_p != rows:
            out2 = out2[:rows]
    return out2.reshape(orig_shape)


class LayerScale:
    """JAX mirror of the PyTorch LayerScale module (forward only)."""

    def __init__(self, dim: int, init_values: float = 1e-05, inplace: bool = False):
        # Matches nn.Parameter(init_values * torch.ones(dim)).
        self.dim = dim
        self.inplace = inplace
        self.gamma = jnp.full((dim,), init_values, dtype=jnp.float32)
        self._tiled_gamma_cache = {}  # hoists jnp.tile/reshape out of the hot path

    def __call__(self, x: jax.Array) -> jax.Array:
        return layer_scale(x, self.gamma, inplace=self.inplace,
                           tiled_gamma_cache=self._tiled_gamma_cache)


if __name__ == "__main__":
    key = jax.random.PRNGKey(0)

    # Primary check: (batch, seq, hidden) = (2, 8, 32) -> lane-densified fold.
    batch, seq, hidden = 2, 8, 32
    x = jax.random.normal(key, (batch, seq, hidden), dtype=jnp.float32)
    module = LayerScale(dim=hidden, init_values=1e-05)
    out = jax.block_until_ready(module(x))
    ref = x * module.gamma.astype(x.dtype)
    assert out.shape == x.shape and out.dtype == x.dtype
    assert jnp.allclose(out, ref, atol=1e-6, rtol=1e-6)

    # Secondary check: ragged rows (rows % fold != 0) exercising pad + slice.
    k2 = jax.random.PRNGKey(1)
    x2 = jax.random.normal(k2, (2, 5, 48), dtype=jnp.float32)
    module2 = LayerScale(dim=48, init_values=1e-05)
    out2 = jax.block_until_ready(module2(x2))
    ref2 = x2 * module2.gamma.astype(x2.dtype)
    assert out2.shape == x2.shape and out2.dtype == x2.dtype
    assert jnp.allclose(out2, ref2, atol=1e-6, rtol=1e-6)

    print("KERNEL_OK")
</pallas_src>

<mosaic_0001>
module attributes {stable_mosaic.version = 11 : i64} {
  func.func @_layer_scale_kernel(%arg0: i32, %arg1: i32, %arg2: memref<1x512xf32, #tpu.memory_space<vmem>>, %arg3: memref<1x512xf32, #tpu.memory_space<vmem>>, %arg4: memref<1x512xf32, #tpu.memory_space<vmem>>) attributes {dimension_semantics = [#tpu.dimension_semantics<parallel>, #tpu.dimension_semantics<parallel>], iteration_bounds = array<i64: 1, 1>, scalar_prefetch = 0 : i64, scratch_operands = 0 : i64, tpu.core_type = #tpu.core_type<tc>, window_params = [{transform_indices = @transform_0, window_bounds = array<i64: 1, 512>}, {transform_indices = @transform_1, window_bounds = array<i64: 1, 512>}, {transform_indices = @transform_2, window_bounds = array<i64: 1, 512>}]} {
    %c0 = arith.constant 0 : index
    %c0_0 = arith.constant 0 : index
    %0 = vector.load %arg2[%c0, %c0_0] : memref<1x512xf32, #tpu.memory_space<vmem>>, vector<1x512xf32>
    %c0_1 = arith.constant 0 : index
    %c0_2 = arith.constant 0 : index
    %1 = vector.load %arg3[%c0_1, %c0_2] : memref<1x512xf32, #tpu.memory_space<vmem>>, vector<1x512xf32>
    %2 = arith.mulf %0, %1 : vector<1x512xf32>
    %c0_3 = arith.constant 0 : index
    %c0_4 = arith.constant 0 : index
    %3 = vector.load %arg4[%c0_3, %c0_4] : memref<1x512xf32, #tpu.memory_space<vmem>>, vector<1x512xf32>
    tpu.vector_store %arg4[%c0_3, %c0_4], %2 {strides = array<i32>} : memref<1x512xf32, #tpu.memory_space<vmem>>, vector<1x512xf32>,
    return
  }
  func.func @transform_0(%arg0: i32, %arg1: i32) -> (i32, i32) {
    %c0_i32 = arith.constant 0 : i32
    return %arg0, %arg1 : i32, i32
  }
  func.func @transform_1(%arg0: i32, %arg1: i32) -> (i32, i32) {
    %c0_i32 = arith.constant 0 : i32
    %c0_i32_0 = arith.constant 0 : i32
    return %c0_i32, %arg1 : i32, i32
  }
  func.func @transform_2(%arg0: i32, %arg1: i32) -> (i32, i32) {
    %c0_i32 = arith.constant 0 : i32
    return %arg0, %arg1 : i32, i32
  }
}

</mosaic_0001>

<llo_original>
// kernel: tpu_custom_call.1
$region0: #{tpu_custom_call.1}
  #allocation0 [shape = 'u32[]', space=smem, size = 0x4, offset = 0x4, fixed_abs, tag = 'smem constant byte address 0x4 - core index']
  #allocation1 [shape = 'u32[144,128]{1,0:T(1,128)}', space=vmem, size = 0x12000, scoped, tag = 'internal scratch']
  %s0 = inlined_call_operand.hbm [shape: f32[1,512], index: 0, kind: input, shape index: {}]
  %s1 = inlined_call_operand.hbm [shape: f32[1,512], index: 1, kind: input, shape index: {}]
  %s2 = inlined_call_operand.hbm [shape: f32[1,512], index: 2, kind: output, shape index: {}]
  %s3 = sld [smem:[#allocation0]]
  $region26: #{tpu_custom_call.1} parent=0
    _
  %s5 = ssub.s32 1, %s3
  %s6 = scalar_select 0, %s5, %s3
  $region1: #{tpu_custom_call.1} parent=0
    #allocation2 [shape = 'u8[2048]{0}', space=vmem, size = 0x800, scoped, tag = 'input window, operand 0, single buffered']
    #allocation3 [shape = 's32[1]{0}', space=sflag, size = 0x4, scoped, tag = 'scoped memory for tpu_custom_call.1']
    #allocation4 [shape = 's32[1]{0}', space=sflag, size = 0x4, scoped, tag = 'scoped memory for tpu_custom_call.1']
    #allocation5 [shape = 'u8[2048]{0}', space=vmem, size = 0x800, scoped, tag = 'input window, operand 1, single buffered']
    #allocation6 [shape = 's32[1]{0}', space=sflag, size = 0x4, scoped, tag = 'scoped memory for tpu_custom_call.1']
    #allocation7 [shape = 'u8[2048]{0}', space=vmem, size = 0x800, scoped, tag = 'output window, operand 0, single buffered']
    %7 = vsyncpa [#allocation3], 0
    %8 = vsyncpa [#allocation6], 0
    %9 = vsyncpa [#allocation4], 0
    // Predicated region
    $region2: #{tpu_custom_call.1} parent=1 // pred_check
      _
    $region3: #{tpu_custom_call.1} parent=1 // pred_check_branch
      %11 = sbr.rel (0) target = $region5
    $region4: #{tpu_custom_call.1} parent=1 // pred_region
      %s13 = ssub.s32 64, 64
      %14 = vsyncadd [#allocation3], %s13
      %s16 = sshll.u32 [#allocation2], 4
      %s17 = int_to_ptr.vmem [resolvable:$true] %s16
      %19 = dma.hbm_to_vmem [thread:$0]  %s0, 64, %s17, [#allocation3]
    $region5: #{tpu_custom_call.1} parent=1 // pred_fallthru
      _
    // Predicated region
    $region6: #{tpu_custom_call.1} parent=1 // pred_check
      _
    $region7: #{tpu_custom_call.1} parent=1 // pred_check_branch
      %21 = sbr.rel (0) target = $region9
    $region8: #{tpu_custom_call.1} parent=1 // pred_region
      %s23 = ssub.s32 64, 64
      %24 = vsyncadd [#allocation6], %s23
      %s26 = sshll.u32 [#allocation5], 4
      %s27 = int_to_ptr.vmem [resolvable:$true] %s26
      %29 = dma.hbm_to_vmem [thread:$0]  %s1, 64, %s27, [#allocation6]
    $region9: #{tpu_custom_call.1} parent=1 // pred_fallthru
      _
    // Predicated region
    $region10: #{tpu_custom_call.1} parent=1 // pred_check
      _
    $region11: #{tpu_custom_call.1} parent=1 // pred_check_branch
      %31 = sbr.rel (0) target = $region13
    $region12: #{tpu_custom_call.1} parent=1 // pred_region
      %32 = dma.done [#allocation3], 64
    $region13: #{tpu_custom_call.1} parent=1 // pred_fallthru
      _
    // Predicated region
    $region14: #{tpu_custom_call.1} parent=1 // pred_check
      _
    $region15: #{tpu_custom_call.1} parent=1 // pred_check_branch
      %34 = sbr.rel (0) target = $region17
    $region16: #{tpu_custom_call.1} parent=1 // pred_region
      %35 = dma.done [#allocation6], 64
    $region17: #{tpu_custom_call.1} parent=1 // pred_fallthru
      _
    %v36 = vld [vmem:[#allocation2] sm:$0xf]
    %v37 = vld [vmem:[#allocation5] sm:$0xf]
    %v38 = vmul.f32 %v36, %v37
    %v39 = vlaneseq
    %vm40 = vcmp.ge.s32.totalorder %v39, 0
    %vm41 = vcmp.lt.s32.totalorder %v39, 512
    %vm42 = vmand %vm40, %vm41
    %43 = vst.msk [vmem:[#allocation7] sm:$0xf] %vm42, %v38
    // Predicated region
    $region18: #{tpu_custom_call.1} parent=1 // pred_check
      _
    $region19: #{tpu_custom_call.1} parent=1 // pred_check_branch
      %45 = sbr.rel (0) target = $region21
    $region20: #{tpu_custom_call.1} parent=1 // pred_region
      %s47 = ssub.s32 64, 64
      %48 = vsyncadd [#allocation4], %s47
      %s50 = sshll.u32 [#allocation7], 4
      %s51 = int_to_ptr.vmem [resolvable:$true] %s50
      %53 = dma.vmem_to_hbm [thread:$0]  %s51, 64, %s2, [#allocation4]
    $region21: #{tpu_custom_call.1} parent=1 // pred_fallthru
      _
    // Predicated region
    $region22: #{tpu_custom_call.1} parent=1 // pred_check
      _
    $region23: #{tpu_custom_call.1} parent=1 // pred_check_branch
      %55 = sbr.rel (0) target = $region25
    $region24: #{tpu_custom_call.1} parent=1 // pred_region
      %56 = dma.done [#allocation4], 64
    $region25: #{tpu_custom_call.1} parent=1 // pred_fallthru
      _
    %57 = vsyncpa [#allocation3], 1
    %58 = vsyncpa [#allocation6], 1
    %59 = vsyncpa [#allocation4], 1

</llo_original>
